<compile_context>
chip_gen: v7x
topology: tpu7x:2x2x1
jax: 0.10.0
libtpu: 0.0.40
codegen_flags: <defaults>
</compile_context>

<pallas_src>
import functools
import math

import jax
import jax.numpy as jnp
import numpy as np
from jax import lax
from jax.experimental import pallas as pl
from jax.experimental.pallas import tpu as pltpu

_LANE = 128


def _vmem_capacity_bytes():
    try:
        return int(pltpu.get_tpu_info().vmem_capacity_bytes)
    except Exception:
        return 64 << 20  # conservative (v7x-sized) fallback


def _gbf_kernel(d_ref, f_ref, o_ref, *, neg_inv_gamma2, bm, steps, steps_pad):
    # d_ref : (bm, 128)         f32  data tile, lane-dense (rows on sublanes)
    # f_ref : (steps_pad, 1)    f32  filters column (resident across the grid)
    # o_ref : (bm*128, steps)   output tile
    # Hoisted once per block: filters replicated across lanes (loop-invariant).
    f_b = jnp.broadcast_to(f_ref[...].astype(jnp.float32), (steps_pad, _LANE))

    def body(g, carry):
        # Aligned 8-row data load; each data element expands to 128 output rows.
        rows8 = d_ref[pl.ds(g * 8, 8), :].astype(jnp.float32)       # (8, 128)
        for j in range(8):                                          # small static unroll
            row = rows8[j:j + 1, :]                                 # (1, 128)
            diff = f_b - row                                        # (steps_pad, 128)
            out_t = jnp.exp((diff * diff) * neg_inv_gamma2)         # EUP, f32
            slab = jnp.transpose(out_t, (1, 0))                     # (128, steps_pad) XLU
            idx = pl.multiple_of(g * (8 * _LANE) + j * _LANE, _LANE)
            o_ref[pl.ds(idx, _LANE), :] = slab[:, :steps].astype(o_ref.dtype)
        return carry

    lax.fori_loop(0, bm // 8, body, 0)


def gbf_expansion(data, filters, gamma, *, block_rows=256, out_dtype=None):
    """Gaussian basis expansion: appends a `steps` axis to `data`."""
    orig_shape = tuple(data.shape)
    steps = int(filters.shape[0])
    if out_dtype is None:
        out_dtype = jnp.promote_types(data.dtype, filters.dtype)
    out_dtype = jnp.dtype(out_dtype)
    out_elt = out_dtype.itemsize

    M = int(np.prod(orig_shape)) if orig_shape else 1
    R = -(-M // _LANE)                       # number of 128-wide data rows
    steps_pad = -(-steps // _LANE) * _LANE   # compute-only padding (never stored)

    # ---- generation-aware tile sizing --------------------------------------
    vmem_cap = _vmem_capacity_bytes()
    if vmem_cap >= (96 << 20):               # v5e / v6e: 128 MiB VMEM
        blk_cap = 16 << 20
        vmem_clamp = 96 << 20
    else:                                    # v7x: 64 MiB VMEM
        blk_cap = 10 << 20
        vmem_clamp = 48 << 20

    unit = _LANE * steps * out_elt           # output bytes per data row
    bm_cap = max(8, (blk_cap // unit) // 8 * 8)
    bm = max(8, min(int(block_rows), bm_cap) // 8 * 8)
    bm = min(bm, max(8, (-(-R // 8)) * 8))   # don't exceed the data (rounded to 8)
    num_blocks = -(-R // bm)
    # Ensure >= 2 grid steps when there is enough data (v7x megacore sharding).
    if num_blocks < 2 and R > 8:
        half = max(8, ((-(-R // 2)) + 7) // 8 * 8)
        if half < bm:
            bm = half
            num_blocks = -(-R // bm)
    R_p = num_blocks * bm                    # input rows, fully padded (cheap)

    # Output rows: exact M (partial last block is handled by Pallas), except the
    # tiny single-block case where the block would exceed the array.
    M_out = bm * _LANE * num_blocks if (num_blocks == 1 and bm * _LANE > M) else M

    # ---- input prep (small tensors; one tiny XLA op each) ------------------
    flat = jnp.ravel(data).astype(jnp.float32)
    if R_p * _LANE != M:
        flat = jnp.pad(flat, (0, R_p * _LANE - M))
    data2d = flat.reshape(R_p, _LANE)

    filt = filters.astype(jnp.float32)
    if steps_pad != steps:
        filt = jnp.pad(filt, (0, steps_pad - steps))
    filt_col = filt.reshape(steps_pad, 1)

    neg_inv_gamma2 = -1.0 / (float(gamma) * float(gamma))

    # ---- VMEM budget / cost hint -------------------------------------------
    out_blk = bm * _LANE * steps * out_elt
    in_blk = bm * _LANE * 4
    f_blk = steps_pad * _LANE * 4            # lane-padded VMEM footprint
    vmem_need = 2 * (out_blk + in_blk) + 4 * f_blk + (4 << 20)
    vmem_limit = int(min(max(vmem_need, 32 << 20), vmem_clamp))

    cost = pl.CostEstimate(
        flops=3 * M * steps,
        transcendentals=M * steps,
        bytes_accessed=4 * M + 4 * steps + out_elt * M * steps,
    )

    kernel = functools.partial(
        _gbf_kernel,
        neg_inv_gamma2=neg_inv_gamma2,
        bm=bm,
        steps=steps,
        steps_pad=steps_pad,
    )

    out = pl.pallas_call(
        kernel,
        out_shape=jax.ShapeDtypeStruct((M_out, steps), out_dtype),
        grid=(num_blocks,),
        in_specs=[
            pl.BlockSpec((bm, _LANE), lambda i: (i, 0)),        # data rows
            pl.BlockSpec((steps_pad, 1), lambda i: (0, 0)),     # filters (resident)
        ],
        out_specs=pl.BlockSpec((bm * _LANE, steps), lambda i: (i, 0)),
        compiler_params=pltpu.CompilerParams(
            dimension_semantics=("parallel",),
            vmem_limit_bytes=vmem_limit,
        ),
        cost_estimate=cost,
    )(data2d, filt_col)

    if M_out != M:
        out = out[:M]                         # tiny single-block case only
    return out.reshape(*orig_shape, steps)


def _reference(data, filters, gamma):
    return jnp.exp(-((data[..., None] - filters) ** 2) / (gamma ** 2))


if __name__ == "__main__":
    key = jax.random.PRNGKey(0)
    k1, k2, k3, k4 = jax.random.split(key, 4)

    # Module init: gbf config -> filters buffer + gamma (Python floats).
    gbf = {"dmin": 0.0, "dmax": 8.0, "steps": 128}
    gamma = (gbf["dmax"] - gbf["dmin"]) / gbf["steps"]
    filters = jnp.linspace(gbf["dmin"], gbf["dmax"], gbf["steps"], dtype=jnp.float32)

    # bond=True path: (B, E) = (2, 16) -> (2, 16, 128)
    d1 = jax.random.uniform(k1, (2, 16), jnp.float32, 0.0, 8.0)
    o1 = jax.block_until_ready(gbf_expansion(d1, filters, gamma))
    np.testing.assert_allclose(np.asarray(o1), np.asarray(_reference(d1, filters, gamma)),
                               rtol=2e-5, atol=1e-5)

    # bond=False path: (B, N, N) = (2, 4, 4) -> (2, 4, 4, 128)
    d2 = jax.random.uniform(k2, (2, 4, 4), jnp.float32, 0.0, 8.0)
    o2 = jax.block_until_ready(gbf_expansion(d2, filters, gamma))
    np.testing.assert_allclose(np.asarray(o2), np.asarray(_reference(d2, filters, gamma)),
                               rtol=2e-5, atol=1e-5)

    # steps % 128 != 0 (masked lane stores, no HBM padding of steps).
    gbf3 = {"dmin": 0.0, "dmax": 5.0, "steps": 50}
    gamma3 = (gbf3["dmax"] - gbf3["dmin"]) / gbf3["steps"]
    filters3 = jnp.linspace(gbf3["dmin"], gbf3["dmax"], gbf3["steps"], dtype=jnp.float32)
    d3 = jax.random.uniform(k3, (3, 100), jnp.float32, 0.0, 5.0)
    o3 = jax.block_until_ready(gbf_expansion(d3, filters3, gamma3))
    np.testing.assert_allclose(np.asarray(o3), np.asarray(_reference(d3, filters3, gamma3)),
                               rtol=2e-5, atol=1e-5)

    # Multi-block grid with a partial (masked) last output block.
    d4 = jax.random.uniform(k4, (3, 700), jnp.float32, 0.0, 8.0)
    o4 = jax.block_until_ready(gbf_expansion(d4, filters, gamma))
    np.testing.assert_allclose(np.asarray(o4), np.asarray(_reference(d4, filters, gamma)),
                               rtol=2e-5, atol=1e-5)

    print("KERNEL_OK")
</pallas_src>

<mosaic_0001>
module attributes {stable_mosaic.version = 11 : i64} {
  func.func @_gbf_kernel(%arg0: i32, %arg1: memref<8x128xf32, #tpu.memory_space<vmem>>, %arg2: memref<128x1xf32, #tpu.memory_space<vmem>>, %arg3: memref<1024x128xf32, #tpu.memory_space<vmem>>) attributes {dimension_semantics = [#tpu.dimension_semantics<parallel>], iteration_bounds = array<i64: 1>, scalar_prefetch = 0 : i64, scratch_operands = 0 : i64, tpu.core_type = #tpu.core_type<tc>, window_params = [{transform_indices = @transform_0, window_bounds = array<i64: 8, 128>}, {pipeline_mode = #tpu.pipeline_mode<synchronous>, transform_indices = @transform_1, window_bounds = array<i64: 128, 1>}, {transform_indices = @transform_2, window_bounds = array<i64: 1024, 128>}]} {
    %c0 = arith.constant 0 : index
    %c0_0 = arith.constant 0 : index
    %0 = vector.load %arg2[%c0, %c0_0] : memref<128x1xf32, #tpu.memory_space<vmem>>, vector<128x1xf32>
    %1 = vector.shape_cast %0 : vector<128x1xf32> to vector<128x1xf32>
    %2 = vector.broadcast %1 : vector<128x1xf32> to vector<128x128xf32>
    %c0_i32 = arith.constant 0 : i32
    %c8_i32 = arith.constant 8 : i32
    %3 = arith.muli %c0_i32, %c8_i32 : i32
    %4 = arith.index_cast %3 : i32 to index
    %c0_1 = arith.constant 0 : index
    %5 = vector.load %arg1[%4, %c0_1] : memref<8x128xf32, #tpu.memory_space<vmem>>, vector<8x128xf32>
    %6 = vector.extract_strided_slice %5 {offsets = [0, 0], sizes = [1, 128], strides = [1, 1]} : vector<8x128xf32> to vector<1x128xf32>
    %7 = vector.broadcast %6 : vector<1x128xf32> to vector<128x128xf32>
    %8 = arith.subf %2, %7 : vector<128x128xf32>
    %9 = arith.mulf %8, %8 : vector<128x128xf32>
    %cst = arith.constant -2.560000e+02 : f32
    %10 = vector.broadcast %cst : f32 to vector<128x128xf32>
    %11 = arith.mulf %9, %10 : vector<128x128xf32>
    %12 = math.exp %11 : vector<128x128xf32>
    %13 = tpu.transpose %12, [1, 0] : vector<128x128xf32> -> vector<128x128xf32>
    %c1024_i32 = arith.constant 1024 : i32
    %14 = arith.muli %c0_i32, %c1024_i32 : i32
    %c0_i32_2 = arith.constant 0 : i32
    %15 = arith.addi %14, %c0_i32_2 : i32
    %16 = tpu.assume_multiple %15, 128 : i32
    %17 = arith.index_cast %16 : i32 to index
    %c0_3 = arith.constant 0 : index
    %18 = vector.load %arg3[%17, %c0_3] : memref<1024x128xf32, #tpu.memory_space<vmem>>, vector<128x128xf32>
    tpu.vector_store %arg3[%17, %c0_3], %13 {strides = array<i32>} : memref<1024x128xf32, #tpu.memory_space<vmem>>, vector<128x128xf32>,
    %19 = vector.extract_strided_slice %5 {offsets = [1, 0], sizes = [1, 128], strides = [1, 1]} : vector<8x128xf32> to vector<1x128xf32>
    %20 = vector.broadcast %19 : vector<1x128xf32> to vector<128x128xf32>
    %21 = arith.subf %2, %20 : vector<128x128xf32>
    %22 = arith.mulf %21, %21 : vector<128x128xf32>
    %cst_4 = arith.constant -2.560000e+02 : f32
    %23 = vector.broadcast %cst_4 : f32 to vector<128x128xf32>
    %24 = arith.mulf %22, %23 : vector<128x128xf32>
    %25 = math.exp %24 : vector<128x128xf32>
    %26 = tpu.transpose %25, [1, 0] : vector<128x128xf32> -> vector<128x128xf32>
    %c1024_i32_5 = arith.constant 1024 : i32
    %27 = arith.muli %c0_i32, %c1024_i32_5 : i32
    %c128_i32 = arith.constant 128 : i32
    %28 = arith.addi %27, %c128_i32 : i32
    %29 = tpu.assume_multiple %28, 128 : i32
    %30 = arith.index_cast %29 : i32 to index
    %c0_6 = arith.constant 0 : index
    %31 = vector.load %arg3[%30, %c0_6] : memref<1024x128xf32, #tpu.memory_space<vmem>>, vector<128x128xf32>
    tpu.vector_store %arg3[%30, %c0_6], %26 {strides = array<i32>} : memref<1024x128xf32, #tpu.memory_space<vmem>>, vector<128x128xf32>,
    %32 = vector.extract_strided_slice %5 {offsets = [2, 0], sizes = [1, 128], strides = [1, 1]} : vector<8x128xf32> to vector<1x128xf32>
    %33 = vector.broadcast %32 : vector<1x128xf32> to vector<128x128xf32>
    %34 = arith.subf %2, %33 : vector<128x128xf32>
    %35 = arith.mulf %34, %34 : vector<128x128xf32>
    %cst_7 = arith.constant -2.560000e+02 : f32
    %36 = vector.broadcast %cst_7 : f32 to vector<128x128xf32>
    %37 = arith.mulf %35, %36 : vector<128x128xf32>
    %38 = math.exp %37 : vector<128x128xf32>
    %39 = tpu.transpose %38, [1, 0] : vector<128x128xf32> -> vector<128x128xf32>
    %c1024_i32_8 = arith.constant 1024 : i32
    %40 = arith.muli %c0_i32, %c1024_i32_8 : i32
    %c256_i32 = arith.constant 256 : i32
    %41 = arith.addi %40, %c256_i32 : i32
    %42 = tpu.assume_multiple %41, 128 : i32
    %43 = arith.index_cast %42 : i32 to index
    %c0_9 = arith.constant 0 : index
    %44 = vector.load %arg3[%43, %c0_9] : memref<1024x128xf32, #tpu.memory_space<vmem>>, vector<128x128xf32>
    tpu.vector_store %arg3[%43, %c0_9], %39 {strides = array<i32>} : memref<1024x128xf32, #tpu.memory_space<vmem>>, vector<128x128xf32>,
    %45 = vector.extract_strided_slice %5 {offsets = [3, 0], sizes = [1, 128], strides = [1, 1]} : vector<8x128xf32> to vector<1x128xf32>
    %46 = vector.broadcast %45 : vector<1x128xf32> to vector<128x128xf32>
    %47 = arith.subf %2, %46 : vector<128x128xf32>
    %48 = arith.mulf %47, %47 : vector<128x128xf32>
    %cst_10 = arith.constant -2.560000e+02 : f32
    %49 = vector.broadcast %cst_10 : f32 to vector<128x128xf32>
    %50 = arith.mulf %48, %49 : vector<128x128xf32>
    %51 = math.exp %50 : vector<128x128xf32>
    %52 = tpu.transpose %51, [1, 0] : vector<128x128xf32> -> vector<128x128xf32>
    %c1024_i32_11 = arith.constant 1024 : i32
    %53 = arith.muli %c0_i32, %c1024_i32_11 : i32
    %c384_i32 = arith.constant 384 : i32
    %54 = arith.addi %53, %c384_i32 : i32
    %55 = tpu.assume_multiple %54, 128 : i32
    %56 = arith.index_cast %55 : i32 to index
    %c0_12 = arith.constant 0 : index
    %57 = vector.load %arg3[%56, %c0_12] : memref<1024x128xf32, #tpu.memory_space<vmem>>, vector<128x128xf32>
    tpu.vector_store %arg3[%56, %c0_12], %52 {strides = array<i32>} : memref<1024x128xf32, #tpu.memory_space<vmem>>, vector<128x128xf32>,
    %58 = vector.extract_strided_slice %5 {offsets = [4, 0], sizes = [1, 128], strides = [1, 1]} : vector<8x128xf32> to vector<1x128xf32>
    %59 = vector.broadcast %58 : vector<1x128xf32> to vector<128x128xf32>
    %60 = arith.subf %2, %59 : vector<128x128xf32>
    %61 = arith.mulf %60, %60 : vector<128x128xf32>
    %cst_13 = arith.constant -2.560000e+02 : f32
    %62 = vector.broadcast %cst_13 : f32 to vector<128x128xf32>
    %63 = arith.mulf %61, %62 : vector<128x128xf32>
    %64 = math.exp %63 : vector<128x128xf32>
    %65 = tpu.transpose %64, [1, 0] : vector<128x128xf32> -> vector<128x128xf32>
    %c1024_i32_14 = arith.constant 1024 : i32
    %66 = arith.muli %c0_i32, %c1024_i32_14 : i32
    %c512_i32 = arith.constant 512 : i32
    %67 = arith.addi %66, %c512_i32 : i32
    %68 = tpu.assume_multiple %67, 128 : i32
    %69 = arith.index_cast %68 : i32 to index
    %c0_15 = arith.constant 0 : index
    %70 = vector.load %arg3[%69, %c0_15] : memref<1024x128xf32, #tpu.memory_space<vmem>>, vector<128x128xf32>
    tpu.vector_store %arg3[%69, %c0_15], %65 {strides = array<i32>} : memref<1024x128xf32, #tpu.memory_space<vmem>>, vector<128x128xf32>,
    %71 = vector.extract_strided_slice %5 {offsets = [5, 0], sizes = [1, 128], strides = [1, 1]} : vector<8x128xf32> to vector<1x128xf32>
    %72 = vector.broadcast %71 : vector<1x128xf32> to vector<128x128xf32>
    %73 = arith.subf %2, %72 : vector<128x128xf32>
    %74 = arith.mulf %73, %73 : vector<128x128xf32>
    %cst_16 = arith.constant -2.560000e+02 : f32
    %75 = vector.broadcast %cst_16 : f32 to vector<128x128xf32>
    %76 = arith.mulf %74, %75 : vector<128x128xf32>
    %77 = math.exp %76 : vector<128x128xf32>
    %78 = tpu.transpose %77, [1, 0] : vector<128x128xf32> -> vector<128x128xf32>
    %c1024_i32_17 = arith.constant 1024 : i32
    %79 = arith.muli %c0_i32, %c1024_i32_17 : i32
    %c640_i32 = arith.constant 640 : i32
    %80 = arith.addi %79, %c640_i32 : i32
    %81 = tpu.assume_multiple %80, 128 : i32
    %82 = arith.index_cast %81 : i32 to index
    %c0_18 = arith.constant 0 : index
    %83 = vector.load %arg3[%82, %c0_18] : memref<1024x128xf32, #tpu.memory_space<vmem>>, vector<128x128xf32>
    tpu.vector_store %arg3[%82, %c0_18], %78 {strides = array<i32>} : memref<1024x128xf32, #tpu.memory_space<vmem>>, vector<128x128xf32>,
    %84 = vector.extract_strided_slice %5 {offsets = [6, 0], sizes = [1, 128], strides = [1, 1]} : vector<8x128xf32> to vector<1x128xf32>
    %85 = vector.broadcast %84 : vector<1x128xf32> to vector<128x128xf32>
    %86 = arith.subf %2, %85 : vector<128x128xf32>
    %87 = arith.mulf %86, %86 : vector<128x128xf32>
    %cst_19 = arith.constant -2.560000e+02 : f32
    %88 = vector.broadcast %cst_19 : f32 to vector<128x128xf32>
    %89 = arith.mulf %87, %88 : vector<128x128xf32>
    %90 = math.exp %89 : vector<128x128xf32>
    %91 = tpu.transpose %90, [1, 0] : vector<128x128xf32> -> vector<128x128xf32>
    %c1024_i32_20 = arith.constant 1024 : i32
    %92 = arith.muli %c0_i32, %c1024_i32_20 : i32
    %c768_i32 = arith.constant 768 : i32
    %93 = arith.addi %92, %c768_i32 : i32
    %94 = tpu.assume_multiple %93, 128 : i32
    %95 = arith.index_cast %94 : i32 to index
    %c0_21 = arith.constant 0 : index
    %96 = vector.load %arg3[%95, %c0_21] : memref<1024x128xf32, #tpu.memory_space<vmem>>, vector<128x128xf32>
    tpu.vector_store %arg3[%95, %c0_21], %91 {strides = array<i32>} : memref<1024x128xf32, #tpu.memory_space<vmem>>, vector<128x128xf32>,
    %97 = vector.extract_strided_slice %5 {offsets = [7, 0], sizes = [1, 128], strides = [1, 1]} : vector<8x128xf32> to vector<1x128xf32>
    %98 = vector.broadcast %97 : vector<1x128xf32> to vector<128x128xf32>
    %99 = arith.subf %2, %98 : vector<128x128xf32>
    %100 = arith.mulf %99, %99 : vector<128x128xf32>
    %cst_22 = arith.constant -2.560000e+02 : f32
    %101 = vector.broadcast %cst_22 : f32 to vector<128x128xf32>
    %102 = arith.mulf %100, %101 : vector<128x128xf32>
    %103 = math.exp %102 : vector<128x128xf32>
    %104 = tpu.transpose %103, [1, 0] : vector<128x128xf32> -> vector<128x128xf32>
    %c1024_i32_23 = arith.constant 1024 : i32
    %105 = arith.muli %c0_i32, %c1024_i32_23 : i32
    %c896_i32 = arith.constant 896 : i32
    %106 = arith.addi %105, %c896_i32 : i32
    %107 = tpu.assume_multiple %106, 128 : i32
    %108 = arith.index_cast %107 : i32 to index
    %c0_24 = arith.constant 0 : index
    %109 = vector.load %arg3[%108, %c0_24] : memref<1024x128xf32, #tpu.memory_space<vmem>>, vector<128x128xf32>
    tpu.vector_store %arg3[%108, %c0_24], %104 {strides = array<i32>} : memref<1024x128xf32, #tpu.memory_space<vmem>>, vector<128x128xf32>,
    %c1_i32 = arith.constant 1 : i32
    return
  }
  func.func @transform_0(%arg0: i32) -> (i32, i32) {
    %c0_i32 = arith.constant 0 : i32
    %c0_i32_0 = arith.constant 0 : i32
    return %arg0, %c0_i32 : i32, i32
  }
  func.func @transform_1(%arg0: i32) -> (i32, i32) {
    %c0_i32 = arith.constant 0 : i32
    %c0_i32_0 = arith.constant 0 : i32
    %c0_i32_1 = arith.constant 0 : i32
    return %c0_i32, %c0_i32_0 : i32, i32
  }
  func.func @transform_2(%arg0: i32) -> (i32, i32) {
    %c0_i32 = arith.constant 0 : i32
    %c0_i32_0 = arith.constant 0 : i32
    return %arg0, %c0_i32 : i32, i32
  }
}

</mosaic_0001>

<llo_original>
// kernel: tpu_custom_call.1
$region0: #{tpu_custom_call.1}
  #allocation0 [shape = 'u32[]', space=smem, size = 0x4, offset = 0x4, fixed_abs, tag = 'smem constant byte address 0x4 - core index']
  #allocation1 [shape = 'u32[144,128]{1,0:T(1,128)}', space=vmem, size = 0x12000, scoped, tag = 'internal scratch']
  %s0 = inlined_call_operand.vmem [shape: f32[8,128], index: 0, kind: input, shape index: {}]
  %s1 = inlined_call_operand.vmem [shape: f32[128,1], index: 1, kind: input, shape index: {}]
  %s2 = inlined_call_operand.hbm [shape: f32[1024,128], index: 2, kind: output, shape index: {}]
  %s3 = sld [smem:[#allocation0]]
  $region18: #{tpu_custom_call.1} parent=0
    _
  %s5 = ssub.s32 1, %s3
  %s6 = scalar_select 0, %s5, %s3
  $region1: #{tpu_custom_call.1} parent=0
    #allocation2 [shape = 'u8[524288]{0}', space=vmem, size = 0x80000, scoped, tag = 'output window, operand 0, single buffered']
    #allocation3 [shape = 's32[1]{0}', space=sflag, size = 0x4, scoped, tag = 'scoped memory for tpu_custom_call.1']
    %7 = vsyncpa [#allocation3], 0
    // Predicated region
    $region2: #{tpu_custom_call.1} parent=1 // pred_check
      _
    $region3: #{tpu_custom_call.1} parent=1 // pred_check_branch
      %9 = sbr.rel (0) target = $region5
    $region4: #{tpu_custom_call.1} parent=1 // pred_region
      _
    $region5: #{tpu_custom_call.1} parent=1 // pred_fallthru
      _
    // Predicated region
    $region6: #{tpu_custom_call.1} parent=1 // pred_check
      _
    $region7: #{tpu_custom_call.1} parent=1 // pred_check_branch
      %11 = sbr.rel (0) target = $region9
    $region8: #{tpu_custom_call.1} parent=1 // pred_region
      _
    $region9: #{tpu_custom_call.1} parent=1 // pred_fallthru
      _
    %v12 = vld [vmem:[%s1] sm:$0xff]
    %v13 = vld [vmem:[%s1 + $0x8] sm:$0xff]
    %v14 = vld [vmem:[%s1 + $0x10] sm:$0xff]
    %v15 = vld [vmem:[%s1 + $0x18] sm:$0xff]
    %v16 = vld [vmem:[%s1 + $0x20] sm:$0xff]
    %v17 = vld [vmem:[%s1 + $0x28] sm:$0xff]
    %v18 = vld [vmem:[%s1 + $0x30] sm:$0xff]
    %v19 = vld [vmem:[%s1 + $0x38] sm:$0xff]
    %v20 = vld [vmem:[%s1 + $0x40] sm:$0xff]
    %v21 = vld [vmem:[%s1 + $0x48] sm:$0xff]
    %v22 = vld [vmem:[%s1 + $0x50] sm:$0xff]
    %v23 = vld [vmem:[%s1 + $0x58] sm:$0xff]
    %v24 = vld [vmem:[%s1 + $0x60] sm:$0xff]
    %v25 = vld [vmem:[%s1 + $0x68] sm:$0xff]
    %v26 = vld [vmem:[%s1 + $0x70] sm:$0xff]
    %v27 = vld [vmem:[%s1 + $0x78] sm:$0xff]
    %29 = vset.pattern.permute.xlu0 0
    %30 = vperm.xlu0 %29, %v12
    %v31 = vpop.permute.xlu0 %30
    %34 = vset.pattern.permute.xlu0 0
    %35 = vperm.xlu0 %34, %v13
    %v36 = vpop.permute.xlu0 %35
    %39 = vset.pattern.permute.xlu0 0
    %40 = vperm.xlu0 %39, %v14
    %v41 = vpop.permute.xlu0 %40
    %44 = vset.pattern.permute.xlu0 0
    %45 = vperm.xlu0 %44, %v15
    %v46 = vpop.permute.xlu0 %45
    %49 = vset.pattern.permute.xlu0 0
    %50 = vperm.xlu0 %49, %v16
    %v51 = vpop.permute.xlu0 %50
    %54 = vset.pattern.permute.xlu0 0
    %55 = vperm.xlu0 %54, %v17
    %v56 = vpop.permute.xlu0 %55
    %59 = vset.pattern.permute.xlu0 0
    %60 = vperm.xlu0 %59, %v18
    %v61 = vpop.permute.xlu0 %60
    %64 = vset.pattern.permute.xlu0 0
    %65 = vperm.xlu0 %64, %v19
    %v66 = vpop.permute.xlu0 %65
    %69 = vset.pattern.permute.xlu0 0
    %70 = vperm.xlu0 %69, %v20
    %v71 = vpop.permute.xlu0 %70
    %74 = vset.pattern.permute.xlu0 0
    %75 = vperm.xlu0 %74, %v21
    %v76 = vpop.permute.xlu0 %75
    %79 = vset.pattern.permute.xlu0 0
    %80 = vperm.xlu0 %79, %v22
    %v81 = vpop.permute.xlu0 %80
    %84 = vset.pattern.permute.xlu0 0
    %85 = vperm.xlu0 %84, %v23
    %v86 = vpop.permute.xlu0 %85
    %89 = vset.pattern.permute.xlu0 0
    %90 = vperm.xlu0 %89, %v24
    %v91 = vpop.permute.xlu0 %90
    %94 = vset.pattern.permute.xlu0 0
    %95 = vperm.xlu0 %94, %v25
    %v96 = vpop.permute.xlu0 %95
    %99 = vset.pattern.permute.xlu0 0
    %100 = vperm.xlu0 %99, %v26
    %v101 = vpop.permute.xlu0 %100
    %104 = vset.pattern.permute.xlu0 0
    %105 = vperm.xlu0 %104, %v27
    %v106 = vpop.permute.xlu0 %105
    %v108 = vld [vmem:[%s0] sm:$0xff]
    %v109 = vlaneseq
    %v110 = vshrl.u32 %v109, 7
    %v111 = vsub.s32 0, %v110
    %v112 = vrot.slane %v108, %v111
    %v113 = vsub.f32 %v31, %v112
    %v114 = vsub.f32 %v36, %v112
    %v115 = vsub.f32 %v41, %v112
    %v116 = vsub.f32 %v46, %v112
    %v117 = vsub.f32 %v51, %v112
    %v118 = vsub.f32 %v56, %v112
    %v119 = vsub.f32 %v61, %v112
    %v120 = vsub.f32 %v66, %v112
    %v121 = vsub.f32 %v71, %v112
    %v122 = vsub.f32 %v76, %v112
    %v123 = vsub.f32 %v81, %v112
    %v124 = vsub.f32 %v86, %v112
    %v125 = vsub.f32 %v91, %v112
    %v126 = vsub.f32 %v96, %v112
    %v127 = vsub.f32 %v101, %v112
    %v128 = vsub.f32 %v106, %v112
    %v129 = vmul.f32 %v113, %v113
    %v130 = vmul.f32 %v114, %v114
    %v131 = vmul.f32 %v115, %v115
    %v132 = vmul.f32 %v116, %v116
    %v133 = vmul.f32 %v117, %v117
    %v134 = vmul.f32 %v118, %v118
    %v135 = vmul.f32 %v119, %v119
    %v136 = vmul.f32 %v120, %v120
    %v137 = vmul.f32 %v121, %v121
    %v138 = vmul.f32 %v122, %v122
    %v139 = vmul.f32 %v123, %v123
    %v140 = vmul.f32 %v124, %v124
    %v141 = vmul.f32 %v125, %v125
    %v142 = vmul.f32 %v126, %v126
    %v143 = vmul.f32 %v127, %v127
    %v144 = vmul.f32 %v128, %v128
    %v145 = vmul.f32 %v129, -256.0
    %v146 = vmul.f32 %v130, -256.0
    %v147 = vmul.f32 %v131, -256.0
    %v148 = vmul.f32 %v132, -256.0
    %v149 = vmul.f32 %v133, -256.0
    %v150 = vmul.f32 %v134, -256.0
    %v151 = vmul.f32 %v135, -256.0
    %v152 = vmul.f32 %v136, -256.0
    %v153 = vmul.f32 %v137, -256.0
    %v154 = vmul.f32 %v138, -256.0
    %v155 = vmul.f32 %v139, -256.0
    %v156 = vmul.f32 %v140, -256.0
    %v157 = vmul.f32 %v141, -256.0
    %v158 = vmul.f32 %v142, -256.0
    %v159 = vmul.f32 %v143, -256.0
    %v160 = vmul.f32 %v144, -256.0
    %v161 = vmul.f32 %v145, 1.442695
    %v162 = vpow.pop %v161
    %v163 = vmul.f32 %v146, 1.442695
    %v164 = vpow.pop %v163
    %v165 = vmul.f32 %v147, 1.442695
    %v166 = vpow.pop %v165
    %v167 = vmul.f32 %v148, 1.442695
    %v168 = vpow.pop %v167
    %v169 = vmul.f32 %v149, 1.442695
    %v170 = vpow.pop %v169
    %v171 = vmul.f32 %v150, 1.442695
    %v172 = vpow.pop %v171
    %v173 = vmul.f32 %v151, 1.442695
    %v174 = vpow.pop %v173
    %v175 = vmul.f32 %v152, 1.442695
    %v176 = vpow.pop %v175
    %v177 = vmul.f32 %v153, 1.442695
    %v178 = vpow.pop %v177
    %v179 = vmul.f32 %v154, 1.442695
    %v180 = vpow.pop %v179
    %v181 = vmul.f32 %v155, 1.442695
    %v182 = vpow.pop %v181
    %v183 = vmul.f32 %v156, 1.442695
    %v184 = vpow.pop %v183
    %v185 = vmul.f32 %v157, 1.442695
    %v186 = vpow.pop %v185
    %v187 = vmul.f32 %v158, 1.442695
    %v188 = vpow.pop %v187
    %v189 = vmul.f32 %v159, 1.442695
    %v190 = vpow.pop %v189
    %v191 = vmul.f32 %v160, 1.442695
    %v192 = vpow.pop %v191
    %193 = vxpose.xlu0.b32.start [1/16] %v162, 128
    %194 = vxpose.xlu0.b32.cont [2/16] %v164, 128
    %195 = vxpose.xlu0.b32.cont [3/16] %v166, 128
    %196 = vxpose.xlu0.b32.cont [4/16] %v168, 128
    %197 = vxpose.xlu0.b32.cont [5/16] %v170, 128
    %198 = vxpose.xlu0.b32.cont [6/16] %v172, 128
    %199 = vxpose.xlu0.b32.cont [7/16] %v174, 128
    %200 = vxpose.xlu0.b32.cont [8/16] %v176, 128
    %201 = vxpose.xlu0.b32.cont [9/16] %v178, 128
    %202 = vxpose.xlu0.b32.cont [10/16] %v180, 128
    %203 = vxpose.xlu0.b32.cont [11/16] %v182, 128
    %204 = vxpose.xlu0.b32.cont [12/16] %v184, 128
    %205 = vxpose.xlu0.b32.cont [13/16] %v186, 128
    %206 = vxpose.xlu0.b32.cont [14/16] %v188, 128
    %207 = vxpose.xlu0.b32.cont [15/16] %v190, 128
    %208 = vxpose.xlu0.b32.end [16/16] %v192, 128
    %v209 = vpop.trf.xlu0
    %v210 = vpop.trf.xlu0
    %v211 = vpop.trf.xlu0
    %v212 = vpop.trf.xlu0
    %v213 = vpop.trf.xlu0
    %v214 = vpop.trf.xlu0
    %v215 = vpop.trf.xlu0
    %v216 = vpop.trf.xlu0
    %v217 = vpop.trf.xlu0
    %v218 = vpop.trf.xlu0
    %v219 = vpop.trf.xlu0
    %v220 = vpop.trf.xlu0
    %v221 = vpop.trf.xlu0
    %v222 = vpop.trf.xlu0
    %v223 = vpop.trf.xlu0
    %v224 = vpop.trf.xlu0
    %225 = vst [vmem:[#allocation2] sm:$0xff] %v209
    %226 = vst [vmem:[#allocation2 + $0x8] sm:$0xff] %v210
    %227 = vst [vmem:[#allocation2 + $0x10] sm:$0xff] %v211
    %228 = vst [vmem:[#allocation2 + $0x18] sm:$0xff] %v212
    %229 = vst [vmem:[#allocation2 + $0x20] sm:$0xff] %v213
    %230 = vst [vmem:[#allocation2 + $0x28] sm:$0xff] %v214
    %231 = vst [vmem:[#allocation2 + $0x30] sm:$0xff] %v215
    %232 = vst [vmem:[#allocation2 + $0x38] sm:$0xff] %v216
    %233 = vst [vmem:[#allocation2 + $0x40] sm:$0xff] %v217
    %234 = vst [vmem:[#allocation2 + $0x48] sm:$0xff] %v218
    %235 = vst [vmem:[#allocation2 + $0x50] sm:$0xff] %v219
    %236 = vst [vmem:[#allocation2 + $0x58] sm:$0xff] %v220
    %237 = vst [vmem:[#allocation2 + $0x60] sm:$0xff] %v221
    %238 = vst [vmem:[#allocation2 + $0x68] sm:$0xff] %v222
    %239 = vst [vmem:[#allocation2 + $0x70] sm:$0xff] %v223
    %240 = vst [vmem:[#allocation2 + $0x78] sm:$0xff] %v224
    %v241 = vlaneseq
    %v242 = vshrl.u32 %v241, 7
    %v243 = vsub.s32 1, %v242
    %v244 = vrot.slane %v108, %v243
    %v245 = vsub.f32 %v31, %v244
    %v246 = vsub.f32 %v36, %v244
    %v247 = vsub.f32 %v41, %v244
    %v248 = vsub.f32 %v46, %v244
    %v249 = vsub.f32 %v51, %v244
    %v250 = vsub.f32 %v56, %v244
    %v251 = vsub.f32 %v61, %v244
    %v252 = vsub.f32 %v66, %v244
    %v253 = vsub.f32 %v71, %v244
    %v254 = vsub.f32 %v76, %v244
    %v255 = vsub.f32 %v81, %v244
    %v256 = vsub.f32 %v86, %v244
    %v257 = vsub.f32 %v91, %v244
    %v258 = vsub.f32 %v96, %v244
    %v259 = vsub.f32 %v101, %v244
    %v260 = vsub.f32 %v106, %v244
    %v261 = vmul.f32 %v245, %v245
    %v262 = vmul.f32 %v246, %v246
    %v263 = vmul.f32 %v247, %v247
    %v264 = vmul.f32 %v248, %v248
    %v265 = vmul.f32 %v249, %v249
    %v266 = vmul.f32 %v250, %v250
    %v267 = vmul.f32 %v251, %v251
    %v268 = vmul.f32 %v252, %v252
    %v269 = vmul.f32 %v253, %v253
    %v270 = vmul.f32 %v254, %v254
    %v271 = vmul.f32 %v255, %v255
    %v272 = vmul.f32 %v256, %v256
    %v273 = vmul.f32 %v257, %v257
    %v274 = vmul.f32 %v258, %v258
    %v275 = vmul.f32 %v259, %v259
    %v276 = vmul.f32 %v260, %v260
    %v277 = vmul.f32 %v261, -256.0
    %v278 = vmul.f32 %v262, -256.0
    %v279 = vmul.f32 %v263, -256.0
    %v280 = vmul.f32 %v264, -256.0
    %v281 = vmul.f32 %v265, -256.0
    %v282 = vmul.f32 %v266, -256.0
    %v283 = vmul.f32 %v267, -256.0
    %v284 = vmul.f32 %v268, -256.0
    %v285 = vmul.f32 %v269, -256.0
    %v286 = vmul.f32 %v270, -256.0
    %v287 = vmul.f32 %v271, -256.0
    %v288 = vmul.f32 %v272, -256.0
    %v289 = vmul.f32 %v273, -256.0
    %v290 = vmul.f32 %v274, -256.0
    %v291 = vmul.f32 %v275, -256.0
    %v292 = vmul.f32 %v276, -256.0
    %v293 = vmul.f32 %v277, 1.442695
    %v294 = vpow.pop %v293
    %v295 = vmul.f32 %v278, 1.442695
    %v296 = vpow.pop %v295
    %v297 = vmul.f32 %v279, 1.442695
    %v298 = vpow.pop %v297
    %v299 = vmul.f32 %v280, 1.442695
    %v300 = vpow.pop %v299
    %v301 = vmul.f32 %v281, 1.442695
    %v302 = vpow.pop %v301
    %v303 = vmul.f32 %v282, 1.442695
    %v304 = vpow.pop %v303
    %v305 = vmul.f32 %v283, 1.442695
    %v306 = vpow.pop %v305
    %v307 = vmul.f32 %v284, 1.442695
    %v308 = vpow.pop %v307
    %v309 = vmul.f32 %v285, 1.442695
    %v310 = vpow.pop %v309
    %v311 = vmul.f32 %v286, 1.442695
    %v312 = vpow.pop %v311
    %v313 = vmul.f32 %v287, 1.442695
    %v314 = vpow.pop %v313
    %v315 = vmul.f32 %v288, 1.442695
    %v316 = vpow.pop %v315
    %v317 = vmul.f32 %v289, 1.442695
    %v318 = vpow.pop %v317
    %v319 = vmul.f32 %v290, 1.442695
    %v320 = vpow.pop %v319
    %v321 = vmul.f32 %v291, 1.442695
    %v322 = vpow.pop %v321
    %v323 = vmul.f32 %v292, 1.442695
    %v324 = vpow.pop %v323
    %325 = vxpose.xlu0.b32.start [1/16] %v294, 128
    %326 = vxpose.xlu0.b32.cont [2/16] %v296, 128
    %327 = vxpose.xlu0.b32.cont [3/16] %v298, 128
    %328 = vxpose.xlu0.b32.cont [4/16] %v300, 128
    %329 = vxpose.xlu0.b32.cont [5/16] %v302, 128
    %330 = vxpose.xlu0.b32.cont [6/16] %v304, 128
    %331 = vxpose.xlu0.b32.cont [7/16] %v306, 128
    %332 = vxpose.xlu0.b32.cont [8/16] %v308, 128
    %333 = vxpose.xlu0.b32.cont [9/16] %v310, 128
    %334 = vxpose.xlu0.b32.cont [10/16] %v312, 128
    %335 = vxpose.xlu0.b32.cont [11/16] %v314, 128
    %336 = vxpose.xlu0.b32.cont [12/16] %v316, 128
    %337 = vxpose.xlu0.b32.cont [13/16] %v318, 128
    %338 = vxpose.xlu0.b32.cont [14/16] %v320, 128
    %339 = vxpose.xlu0.b32.cont [15/16] %v322, 128
    %340 = vxpose.xlu0.b32.end [16/16] %v324, 128
    %v341 = vpop.trf.xlu0
    %v342 = vpop.trf.xlu0
    %v343 = vpop.trf.xlu0
    %v344 = vpop.trf.xlu0
    %v345 = vpop.trf.xlu0
    %v346 = vpop.trf.xlu0
    %v347 = vpop.trf.xlu0
    %v348 = vpop.trf.xlu0
    %v349 = vpop.trf.xlu0
    %v350 = vpop.trf.xlu0
    %v351 = vpop.trf.xlu0
    %v352 = vpop.trf.xlu0
    %v353 = vpop.trf.xlu0
    %v354 = vpop.trf.xlu0
    %v355 = vpop.trf.xlu0
    %v356 = vpop.trf.xlu0
    %s357 = scalar_lea.vmem [#allocation2], 128
    %358 = vst [vmem:[%s357] sm:$0xff] %v341
    %359 = vst [vmem:[%s357 + $0x8] sm:$0xff] %v342
    %360 = vst [vmem:[%s357 + $0x10] sm:$0xff] %v343
    %361 = vst [vmem:[%s357 + $0x18] sm:$0xff] %v344
    %362 = vst [vmem:[%s357 + $0x20] sm:$0xff] %v345
    %363 = vst [vmem:[%s357 + $0x28] sm:$0xff] %v346
    %364 = vst [vmem:[%s357 + $0x30] sm:$0xff] %v347
    %365 = vst [vmem:[%s357 + $0x38] sm:$0xff] %v348
    %366 = vst [vmem:[%s357 + $0x40] sm:$0xff] %v349
    %367 = vst [vmem:[%s357 + $0x48] sm:$0xff] %v350
    %368 = vst [vmem:[%s357 + $0x50] sm:$0xff] %v351
    %369 = vst [vmem:[%s357 + $0x58] sm:$0xff] %v352
    %370 = vst [vmem:[%s357 + $0x60] sm:$0xff] %v353
    %371 = vst [vmem:[%s357 + $0x68] sm:$0xff] %v354
    %372 = vst [vmem:[%s357 + $0x70] sm:$0xff] %v355
    %373 = vst [vmem:[%s357 + $0x78] sm:$0xff] %v356
    %v374 = vlaneseq
    %v375 = vshrl.u32 %v374, 7
    %v376 = vsub.s32 2, %v375
    %v377 = vrot.slane %v108, %v376
    %v378 = vsub.f32 %v31, %v377
    %v379 = vsub.f32 %v36, %v377
    %v380 = vsub.f32 %v41, %v377
    %v381 = vsub.f32 %v46, %v377
    %v382 = vsub.f32 %v51, %v377
    %v383 = vsub.f32 %v56, %v377
    %v384 = vsub.f32 %v61, %v377
    %v385 = vsub.f32 %v66, %v377
    %v386 = vsub.f32 %v71, %v377
    %v387 = vsub.f32 %v76, %v377
    %v388 = vsub.f32 %v81, %v377
    %v389 = vsub.f32 %v86, %v377
    %v390 = vsub.f32 %v91, %v377
    %v391 = vsub.f32 %v96, %v377
    %v392 = vsub.f32 %v101, %v377
    %v393 = vsub.f32 %v106, %v377
    %v394 = vmul.f32 %v378, %v378
    %v395 = vmul.f32 %v379, %v379
    %v396 = vmul.f32 %v380, %v380
    %v397 = vmul.f32 %v381, %v381
    %v398 = vmul.f32 %v382, %v382
    %v399 = vmul.f32 %v383, %v383
    %v400 = vmul.f32 %v384, %v384
    %v401 = vmul.f32 %v385, %v385
    %v402 = vmul.f32 %v386, %v386
    %v403 = vmul.f32 %v387, %v387
    %v404 = vmul.f32 %v388, %v388
    %v405 = vmul.f32 %v389, %v389
    %v406 = vmul.f32 %v390, %v390
    %v407 = vmul.f32 %v391, %v391
    %v408 = vmul.f32 %v392, %v392
    %v409 = vmul.f32 %v393, %v393
    %v410 = vmul.f32 %v394, -256.0
    %v411 = vmul.f32 %v395, -256.0
    %v412 = vmul.f32 %v396, -256.0
    %v413 = vmul.f32 %v397, -256.0
    %v414 = vmul.f32 %v398, -256.0
    %v415 = vmul.f32 %v399, -256.0
    %v416 = vmul.f32 %v400, -256.0
    %v417 = vmul.f32 %v401, -256.0
    %v418 = vmul.f32 %v402, -256.0
    %v419 = vmul.f32 %v403, -256.0
    %v420 = vmul.f32 %v404, -256.0
    %v421 = vmul.f32 %v405, -256.0
    %v422 = vmul.f32 %v406, -256.0
    %v423 = vmul.f32 %v407, -256.0
    %v424 = vmul.f32 %v408, -256.0
    %v425 = vmul.f32 %v409, -256.0
    %v426 = vmul.f32 %v410, 1.442695
    %v427 = vpow.pop %v426
    %v428 = vmul.f32 %v411, 1.442695
    %v429 = vpow.pop %v428
    %v430 = vmul.f32 %v412, 1.442695
    %v431 = vpow.pop %v430
    %v432 = vmul.f32 %v413, 1.442695
    %v433 = vpow.pop %v432
    %v434 = vmul.f32 %v414, 1.442695
    %v435 = vpow.pop %v434
    %v436 = vmul.f32 %v415, 1.442695
    %v437 = vpow.pop %v436
    %v438 = vmul.f32 %v416, 1.442695
    %v439 = vpow.pop %v438
    %v440 = vmul.f32 %v417, 1.442695
    %v441 = vpow.pop %v440
    %v442 = vmul.f32 %v418, 1.442695
    %v443 = vpow.pop %v442
    %v444 = vmul.f32 %v419, 1.442695
    %v445 = vpow.pop %v444
    %v446 = vmul.f32 %v420, 1.442695
    %v447 = vpow.pop %v446
    %v448 = vmul.f32 %v421, 1.442695
    %v449 = vpow.pop %v448
    %v450 = vmul.f32 %v422, 1.442695
    %v451 = vpow.pop %v450
    %v452 = vmul.f32 %v423, 1.442695
    %v453 = vpow.pop %v452
    %v454 = vmul.f32 %v424, 1.442695
    %v455 = vpow.pop %v454
    %v456 = vmul.f32 %v425, 1.442695
    %v457 = vpow.pop %v456
    %458 = vxpose.xlu0.b32.start [1/16] %v427, 128
    %459 = vxpose.xlu0.b32.cont [2/16] %v429, 128
    %460 = vxpose.xlu0.b32.cont [3/16] %v431, 128
    %461 = vxpose.xlu0.b32.cont [4/16] %v433, 128
    %462 = vxpose.xlu0.b32.cont [5/16] %v435, 128
    %463 = vxpose.xlu0.b32.cont [6/16] %v437, 128
    %464 = vxpose.xlu0.b32.cont [7/16] %v439, 128
    %465 = vxpose.xlu0.b32.cont [8/16] %v441, 128
    %466 = vxpose.xlu0.b32.cont [9/16] %v443, 128
    %467 = vxpose.xlu0.b32.cont [10/16] %v445, 128
    %468 = vxpose.xlu0.b32.cont [11/16] %v447, 128
    %469 = vxpose.xlu0.b32.cont [12/16] %v449, 128
    %470 = vxpose.xlu0.b32.cont [13/16] %v451, 128
    %471 = vxpose.xlu0.b32.cont [14/16] %v453, 128
    %472 = vxpose.xlu0.b32.cont [15/16] %v455, 128
    %473 = vxpose.xlu0.b32.end [16/16] %v457, 128
    %v474 = vpop.trf.xlu0
    %v475 = vpop.trf.xlu0
    %v476 = vpop.trf.xlu0
    %v477 = vpop.trf.xlu0
    %v478 = vpop.trf.xlu0
    %v479 = vpop.trf.xlu0
    %v480 = vpop.trf.xlu0
    %v481 = vpop.trf.xlu0
    %v482 = vpop.trf.xlu0
    %v483 = vpop.trf.xlu0
    %v484 = vpop.trf.xlu0
    %v485 = vpop.trf.xlu0
    %v486 = vpop.trf.xlu0
    %v487 = vpop.trf.xlu0
    %v488 = vpop.trf.xlu0
    %v489 = vpop.trf.xlu0
    %s490 = scalar_lea.vmem [#allocation2], 256
    %491 = vst [vmem:[%s490] sm:$0xff] %v474
    %492 = vst [vmem:[%s490 + $0x8] sm:$0xff] %v475
    %493 = vst [vmem:[%s490 + $0x10] sm:$0xff] %v476
    %494 = vst [vmem:[%s490 + $0x18] sm:$0xff] %v477
    %495 = vst [vmem:[%s490 + $0x20] sm:$0xff] %v478
    %496 = vst [vmem:[%s490 + $0x28] sm:$0xff] %v479
    %497 = vst [vmem:[%s490 + $0x30] sm:$0xff] %v480
    %498 = vst [vmem:[%s490 + $0x38] sm:$0xff] %v481
    %499 = vst [vmem:[%s490 + $0x40] sm:$0xff] %v482
    %500 = vst [vmem:[%s490 + $0x48] sm:$0xff] %v483
    %501 = vst [vmem:[%s490 + $0x50] sm:$0xff] %v484
    %502 = vst [vmem:[%s490 + $0x58] sm:$0xff] %v485
    %503 = vst [vmem:[%s490 + $0x60] sm:$0xff] %v486
    %504 = vst [vmem:[%s490 + $0x68] sm:$0xff] %v487
    %505 = vst [vmem:[%s490 + $0x70] sm:$0xff] %v488
    %506 = vst [vmem:[%s490 + $0x78] sm:$0xff] %v489
    %v507 = vlaneseq
    %v508 = vshrl.u32 %v507, 7
    %v509 = vsub.s32 3, %v508
    %v510 = vrot.slane %v108, %v509
    %v511 = vsub.f32 %v31, %v510
    %v512 = vsub.f32 %v36, %v510
    %v513 = vsub.f32 %v41, %v510
    %v514 = vsub.f32 %v46, %v510
    %v515 = vsub.f32 %v51, %v510
    %v516 = vsub.f32 %v56, %v510
    %v517 = vsub.f32 %v61, %v510
    %v518 = vsub.f32 %v66, %v510
    %v519 = vsub.f32 %v71, %v510
    %v520 = vsub.f32 %v76, %v510
    %v521 = vsub.f32 %v81, %v510
    %v522 = vsub.f32 %v86, %v510
    %v523 = vsub.f32 %v91, %v510
    %v524 = vsub.f32 %v96, %v510
    %v525 = vsub.f32 %v101, %v510
    %v526 = vsub.f32 %v106, %v510
    %v527 = vmul.f32 %v511, %v511
    %v528 = vmul.f32 %v512, %v512
    %v529 = vmul.f32 %v513, %v513
    %v530 = vmul.f32 %v514, %v514
    %v531 = vmul.f32 %v515, %v515
    %v532 = vmul.f32 %v516, %v516
    %v533 = vmul.f32 %v517, %v517
    %v534 = vmul.f32 %v518, %v518
    %v535 = vmul.f32 %v519, %v519
    %v536 = vmul.f32 %v520, %v520
    %v537 = vmul.f32 %v521, %v521
    %v538 = vmul.f32 %v522, %v522
    %v539 = vmul.f32 %v523, %v523
    %v540 = vmul.f32 %v524, %v524
    %v541 = vmul.f32 %v525, %v525
    %v542 = vmul.f32 %v526, %v526
    %v543 = vmul.f32 %v527, -256.0
    %v544 = vmul.f32 %v528, -256.0
    %v545 = vmul.f32 %v529, -256.0
    %v546 = vmul.f32 %v530, -256.0
    %v547 = vmul.f32 %v531, -256.0
    %v548 = vmul.f32 %v532, -256.0
    %v549 = vmul.f32 %v533, -256.0
    %v550 = vmul.f32 %v534, -256.0
    %v551 = vmul.f32 %v535, -256.0
    %v552 = vmul.f32 %v536, -256.0
    %v553 = vmul.f32 %v537, -256.0
    %v554 = vmul.f32 %v538, -256.0
    %v555 = vmul.f32 %v539, -256.0
    %v556 = vmul.f32 %v540, -256.0
    %v557 = vmul.f32 %v541, -256.0
    %v558 = vmul.f32 %v542, -256.0
    %v559 = vmul.f32 %v543, 1.442695
    %v560 = vpow.pop %v559
    %v561 = vmul.f32 %v544, 1.442695
    %v562 = vpow.pop %v561
    %v563 = vmul.f32 %v545, 1.442695
    %v564 = vpow.pop %v563
    %v565 = vmul.f32 %v546, 1.442695
    %v566 = vpow.pop %v565
    %v567 = vmul.f32 %v547, 1.442695
    %v568 = vpow.pop %v567
    %v569 = vmul.f32 %v548, 1.442695
    %v570 = vpow.pop %v569
    %v571 = vmul.f32 %v549, 1.442695
    %v572 = vpow.pop %v571
    %v573 = vmul.f32 %v550, 1.442695
    %v574 = vpow.pop %v573
    %v575 = vmul.f32 %v551, 1.442695
    %v576 = vpow.pop %v575
    %v577 = vmul.f32 %v552, 1.442695
    %v578 = vpow.pop %v577
    %v579 = vmul.f32 %v553, 1.442695
    %v580 = vpow.pop %v579
    %v581 = vmul.f32 %v554, 1.442695
    %v582 = vpow.pop %v581
    %v583 = vmul.f32 %v555, 1.442695
    %v584 = vpow.pop %v583
    %v585 = vmul.f32 %v556, 1.442695
    %v586 = vpow.pop %v585
    %v587 = vmul.f32 %v557, 1.442695
    %v588 = vpow.pop %v587
    %v589 = vmul.f32 %v558, 1.442695
    %v590 = vpow.pop %v589
    %591 = vxpose.xlu0.b32.start [1/16] %v560, 128
    %592 = vxpose.xlu0.b32.cont [2/16] %v562, 128
    %593 = vxpose.xlu0.b32.cont [3/16] %v564, 128
    %594 = vxpose.xlu0.b32.cont [4/16] %v566, 128
    %595 = vxpose.xlu0.b32.cont [5/16] %v568, 128
    %596 = vxpose.xlu0.b32.cont [6/16] %v570, 128
    %597 = vxpose.xlu0.b32.cont [7/16] %v572, 128
    %598 = vxpose.xlu0.b32.cont [8/16] %v574, 128
    %599 = vxpose.xlu0.b32.cont [9/16] %v576, 128
    %600 = vxpose.xlu0.b32.cont [10/16] %v578, 128
    %601 = vxpose.xlu0.b32.cont [11/16] %v580, 128
    %602 = vxpose.xlu0.b32.cont [12/16] %v582, 128
    %603 = vxpose.xlu0.b32.cont [13/16] %v584, 128
    %604 = vxpose.xlu0.b32.cont [14/16] %v586, 128
    %605 = vxpose.xlu0.b32.cont [15/16] %v588, 128
    %606 = vxpose.xlu0.b32.end [16/16] %v590, 128
    %v607 = vpop.trf.xlu0
    %v608 = vpop.trf.xlu0
    %v609 = vpop.trf.xlu0
    %v610 = vpop.trf.xlu0
    %v611 = vpop.trf.xlu0
    %v612 = vpop.trf.xlu0
    %v613 = vpop.trf.xlu0
    %v614 = vpop.trf.xlu0
    %v615 = vpop.trf.xlu0
    %v616 = vpop.trf.xlu0
    %v617 = vpop.trf.xlu0
    %v618 = vpop.trf.xlu0
    %v619 = vpop.trf.xlu0
    %v620 = vpop.trf.xlu0
    %v621 = vpop.trf.xlu0
    %v622 = vpop.trf.xlu0
    %s623 = scalar_lea.vmem [#allocation2], 384
    %624 = vst [vmem:[%s623] sm:$0xff] %v607
    %625 = vst [vmem:[%s623 + $0x8] sm:$0xff] %v608
    %626 = vst [vmem:[%s623 + $0x10] sm:$0xff] %v609
    %627 = vst [vmem:[%s623 + $0x18] sm:$0xff] %v610
    %628 = vst [vmem:[%s623 + $0x20] sm:$0xff] %v611
    %629 = vst [vmem:[%s623 + $0x28] sm:$0xff] %v612
    %630 = vst [vmem:[%s623 + $0x30] sm:$0xff] %v613
    %631 = vst [vmem:[%s623 + $0x38] sm:$0xff] %v614
    %632 = vst [vmem:[%s623 + $0x40] sm:$0xff] %v615
    %633 = vst [vmem:[%s623 + $0x48] sm:$0xff] %v616
    %634 = vst [vmem:[%s623 + $0x50] sm:$0xff] %v617
    %635 = vst [vmem:[%s623 + $0x58] sm:$0xff] %v618
    %636 = vst [vmem:[%s623 + $0x60] sm:$0xff] %v619
    %637 = vst [vmem:[%s623 + $0x68] sm:$0xff] %v620
    %638 = vst [vmem:[%s623 + $0x70] sm:$0xff] %v621
    %639 = vst [vmem:[%s623 + $0x78] sm:$0xff] %v622
    %v640 = vlaneseq
    %v641 = vshrl.u32 %v640, 7
    %v642 = vsub.s32 4, %v641
    %v643 = vrot.slane %v108, %v642
    %v644 = vsub.f32 %v31, %v643
    %v645 = vsub.f32 %v36, %v643
    %v646 = vsub.f32 %v41, %v643
    %v647 = vsub.f32 %v46, %v643
    %v648 = vsub.f32 %v51, %v643
    %v649 = vsub.f32 %v56, %v643
    %v650 = vsub.f32 %v61, %v643
    %v651 = vsub.f32 %v66, %v643
    %v652 = vsub.f32 %v71, %v643
    %v653 = vsub.f32 %v76, %v643
    %v654 = vsub.f32 %v81, %v643
    %v655 = vsub.f32 %v86, %v643
    %v656 = vsub.f32 %v91, %v643
    %v657 = vsub.f32 %v96, %v643
    %v658 = vsub.f32 %v101, %v643
    %v659 = vsub.f32 %v106, %v643
    %v660 = vmul.f32 %v644, %v644
    %v661 = vmul.f32 %v645, %v645
    %v662 = vmul.f32 %v646, %v646
    %v663 = vmul.f32 %v647, %v647
    %v664 = vmul.f32 %v648, %v648
    %v665 = vmul.f32 %v649, %v649
    %v666 = vmul.f32 %v650, %v650
    %v667 = vmul.f32 %v651, %v651
    %v668 = vmul.f32 %v652, %v652
    %v669 = vmul.f32 %v653, %v653
    %v670 = vmul.f32 %v654, %v654
    %v671 = vmul.f32 %v655, %v655
    %v672 = vmul.f32 %v656, %v656
    %v673 = vmul.f32 %v657, %v657
    %v674 = vmul.f32 %v658, %v658
    %v675 = vmul.f32 %v659, %v659
    %v676 = vmul.f32 %v660, -256.0
    %v677 = vmul.f32 %v661, -256.0
    %v678 = vmul.f32 %v662, -256.0
    %v679 = vmul.f32 %v663, -256.0
    %v680 = vmul.f32 %v664, -256.0
    %v681 = vmul.f32 %v665, -256.0
    %v682 = vmul.f32 %v666, -256.0
    %v683 = vmul.f32 %v667, -256.0
    %v684 = vmul.f32 %v668, -256.0
    %v685 = vmul.f32 %v669, -256.0
    %v686 = vmul.f32 %v670, -256.0
    %v687 = vmul.f32 %v671, -256.0
    %v688 = vmul.f32 %v672, -256.0
    %v689 = vmul.f32 %v673, -256.0
    %v690 = vmul.f32 %v674, -256.0
    %v691 = vmul.f32 %v675, -256.0
    %v692 = vmul.f32 %v676, 1.442695
    %v693 = vpow.pop %v692
    %v694 = vmul.f32 %v677, 1.442695
    %v695 = vpow.pop %v694
    %v696 = vmul.f32 %v678, 1.442695
    %v697 = vpow.pop %v696
    %v698 = vmul.f32 %v679, 1.442695
    %v699 = vpow.pop %v698
    %v700 = vmul.f32 %v680, 1.442695
    %v701 = vpow.pop %v700
    %v702 = vmul.f32 %v681, 1.442695
    %v703 = vpow.pop %v702
    %v704 = vmul.f32 %v682, 1.442695
    %v705 = vpow.pop %v704
    %v706 = vmul.f32 %v683, 1.442695
    %v707 = vpow.pop %v706
    %v708 = vmul.f32 %v684, 1.442695
    %v709 = vpow.pop %v708
    %v710 = vmul.f32 %v685, 1.442695
    %v711 = vpow.pop %v710
    %v712 = vmul.f32 %v686, 1.442695
    %v713 = vpow.pop %v712
    %v714 = vmul.f32 %v687, 1.442695
    %v715 = vpow.pop %v714
    %v716 = vmul.f32 %v688, 1.442695
    %v717 = vpow.pop %v716
    %v718 = vmul.f32 %v689, 1.442695
    %v719 = vpow.pop %v718
    %v720 = vmul.f32 %v690, 1.442695
    %v721 = vpow.pop %v720
    %v722 = vmul.f32 %v691, 1.442695
    %v723 = vpow.pop %v722
    %724 = vxpose.xlu0.b32.start [1/16] %v693, 128
    %725 = vxpose.xlu0.b32.cont [2/16] %v695, 128
    %726 = vxpose.xlu0.b32.cont [3/16] %v697, 128
    %727 = vxpose.xlu0.b32.cont [4/16] %v699, 128
    %728 = vxpose.xlu0.b32.cont [5/16] %v701, 128
    %729 = vxpose.xlu0.b32.cont [6/16] %v703, 128
    %730 = vxpose.xlu0.b32.cont [7/16] %v705, 128
    %731 = vxpose.xlu0.b32.cont [8/16] %v707, 128
    %732 = vxpose.xlu0.b32.cont [9/16] %v709, 128
    %733 = vxpose.xlu0.b32.cont [10/16] %v711, 128
    %734 = vxpose.xlu0.b32.cont [11/16] %v713, 128
    %735 = vxpose.xlu0.b32.cont [12/16] %v715, 128
    %736 = vxpose.xlu0.b32.cont [13/16] %v717, 128
    %737 = vxpose.xlu0.b32.cont [14/16] %v719, 128
    %738 = vxpose.xlu0.b32.cont [15/16] %v721, 128
    %739 = vxpose.xlu0.b32.end [16/16] %v723, 128
    %v740 = vpop.trf.xlu0
    %v741 = vpop.trf.xlu0
    %v742 = vpop.trf.xlu0
    %v743 = vpop.trf.xlu0
    %v744 = vpop.trf.xlu0
    %v745 = vpop.trf.xlu0
    %v746 = vpop.trf.xlu0
    %v747 = vpop.trf.xlu0
    %v748 = vpop.trf.xlu0
    %v749 = vpop.trf.xlu0
    %v750 = vpop.trf.xlu0
    %v751 = vpop.trf.xlu0
    %v752 = vpop.trf.xlu0
    %v753 = vpop.trf.xlu0
    %v754 = vpop.trf.xlu0
    %v755 = vpop.trf.xlu0
    %s756 = scalar_lea.vmem [#allocation2], 512
    %757 = vst [vmem:[%s756] sm:$0xff] %v740
    %758 = vst [vmem:[%s756 + $0x8] sm:$0xff] %v741
    %759 = vst [vmem:[%s756 + $0x10] sm:$0xff] %v742
    %760 = vst [vmem:[%s756 + $0x18] sm:$0xff] %v743
    %761 = vst [vmem:[%s756 + $0x20] sm:$0xff] %v744
    %762 = vst [vmem:[%s756 + $0x28] sm:$0xff] %v745
    %763 = vst [vmem:[%s756 + $0x30] sm:$0xff] %v746
    %764 = vst [vmem:[%s756 + $0x38] sm:$0xff] %v747
    %765 = vst [vmem:[%s756 + $0x40] sm:$0xff] %v748
    %766 = vst [vmem:[%s756 + $0x48] sm:$0xff] %v749
    %767 = vst [vmem:[%s756 + $0x50] sm:$0xff] %v750
    %768 = vst [vmem:[%s756 + $0x58] sm:$0xff] %v751
    %769 = vst [vmem:[%s756 + $0x60] sm:$0xff] %v752
    %770 = vst [vmem:[%s756 + $0x68] sm:$0xff] %v753
    %771 = vst [vmem:[%s756 + $0x70] sm:$0xff] %v754
    %772 = vst [vmem:[%s756 + $0x78] sm:$0xff] %v755
    %v773 = vlaneseq
    %v774 = vshrl.u32 %v773, 7
    %v775 = vsub.s32 5, %v774
    %v776 = vrot.slane %v108, %v775
    %v777 = vsub.f32 %v31, %v776
    %v778 = vsub.f32 %v36, %v776
    %v779 = vsub.f32 %v41, %v776
    %v780 = vsub.f32 %v46, %v776
    %v781 = vsub.f32 %v51, %v776
    %v782 = vsub.f32 %v56, %v776
    %v783 = vsub.f32 %v61, %v776
    %v784 = vsub.f32 %v66, %v776
    %v785 = vsub.f32 %v71, %v776
    %v786 = vsub.f32 %v76, %v776
    %v787 = vsub.f32 %v81, %v776
    %v788 = vsub.f32 %v86, %v776
    %v789 = vsub.f32 %v91, %v776
    %v790 = vsub.f32 %v96, %v776
    %v791 = vsub.f32 %v101, %v776
    %v792 = vsub.f32 %v106, %v776
    %v793 = vmul.f32 %v777, %v777
    %v794 = vmul.f32 %v778, %v778
    %v795 = vmul.f32 %v779, %v779
    %v796 = vmul.f32 %v780, %v780
    %v797 = vmul.f32 %v781, %v781
    %v798 = vmul.f32 %v782, %v782
    %v799 = vmul.f32 %v783, %v783
    %v800 = vmul.f32 %v784, %v784
    %v801 = vmul.f32 %v785, %v785
    %v802 = vmul.f32 %v786, %v786
    %v803 = vmul.f32 %v787, %v787
    %v804 = vmul.f32 %v788, %v788
    %v805 = vmul.f32 %v789, %v789
    %v806 = vmul.f32 %v790, %v790
    %v807 = vmul.f32 %v791, %v791
    %v808 = vmul.f32 %v792, %v792
    %v809 = vmul.f32 %v793, -256.0
    %v810 = vmul.f32 %v794, -256.0
    %v811 = vmul.f32 %v795, -256.0
    %v812 = vmul.f32 %v796, -256.0
    %v813 = vmul.f32 %v797, -256.0
    %v814 = vmul.f32 %v798, -256.0
    %v815 = vmul.f32 %v799, -256.0
    %v816 = vmul.f32 %v800, -256.0
    %v817 = vmul.f32 %v801, -256.0
    %v818 = vmul.f32 %v802, -256.0
    %v819 = vmul.f32 %v803, -256.0
    %v820 = vmul.f32 %v804, -256.0
    %v821 = vmul.f32 %v805, -256.0
    %v822 = vmul.f32 %v806, -256.0
    %v823 = vmul.f32 %v807, -256.0
    %v824 = vmul.f32 %v808, -256.0
    %v825 = vmul.f32 %v809, 1.442695
    %v826 = vpow.pop %v825
    %v827 = vmul.f32 %v810, 1.442695
    %v828 = vpow.pop %v827
    %v829 = vmul.f32 %v811, 1.442695
    %v830 = vpow.pop %v829
    %v831 = vmul.f32 %v812, 1.442695
    %v832 = vpow.pop %v831
    %v833 = vmul.f32 %v813, 1.442695
    %v834 = vpow.pop %v833
    %v835 = vmul.f32 %v814, 1.442695
    %v836 = vpow.pop %v835
    %v837 = vmul.f32 %v815, 1.442695
    %v838 = vpow.pop %v837
    %v839 = vmul.f32 %v816, 1.442695
    %v840 = vpow.pop %v839
    %v841 = vmul.f32 %v817, 1.442695
    %v842 = vpow.pop %v841
    %v843 = vmul.f32 %v818, 1.442695
    %v844 = vpow.pop %v843
    %v845 = vmul.f32 %v819, 1.442695
    %v846 = vpow.pop %v845
    %v847 = vmul.f32 %v820, 1.442695
    %v848 = vpow.pop %v847
    %v849 = vmul.f32 %v821, 1.442695
    %v850 = vpow.pop %v849
    %v851 = vmul.f32 %v822, 1.442695
    %v852 = vpow.pop %v851
    %v853 = vmul.f32 %v823, 1.442695
    %v854 = vpow.pop %v853
    %v855 = vmul.f32 %v824, 1.442695
    %v856 = vpow.pop %v855
    %857 = vxpose.xlu0.b32.start [1/16] %v826, 128
    %858 = vxpose.xlu0.b32.cont [2/16] %v828, 128
    %859 = vxpose.xlu0.b32.cont [3/16] %v830, 128
    %860 = vxpose.xlu0.b32.cont [4/16] %v832, 128
    %861 = vxpose.xlu0.b32.cont [5/16] %v834, 128
    %862 = vxpose.xlu0.b32.cont [6/16] %v836, 128
    %863 = vxpose.xlu0.b32.cont [7/16] %v838, 128
    %864 = vxpose.xlu0.b32.cont [8/16] %v840, 128
    %865 = vxpose.xlu0.b32.cont [9/16] %v842, 128
    %866 = vxpose.xlu0.b32.cont [10/16] %v844, 128
    %867 = vxpose.xlu0.b32.cont [11/16] %v846, 128
    %868 = vxpose.xlu0.b32.cont [12/16] %v848, 128
    %869 = vxpose.xlu0.b32.cont [13/16] %v850, 128
    %870 = vxpose.xlu0.b32.cont [14/16] %v852, 128
    %871 = vxpose.xlu0.b32.cont [15/16] %v854, 128
    %872 = vxpose.xlu0.b32.end [16/16] %v856, 128
    %v873 = vpop.trf.xlu0
    %v874 = vpop.trf.xlu0
    %v875 = vpop.trf.xlu0
    %v876 = vpop.trf.xlu0
    %v877 = vpop.trf.xlu0
    %v878 = vpop.trf.xlu0
    %v879 = vpop.trf.xlu0
    %v880 = vpop.trf.xlu0
    %v881 = vpop.trf.xlu0
    %v882 = vpop.trf.xlu0
    %v883 = vpop.trf.xlu0
    %v884 = vpop.trf.xlu0
    %v885 = vpop.trf.xlu0
    %v886 = vpop.trf.xlu0
    %v887 = vpop.trf.xlu0
    %v888 = vpop.trf.xlu0
    %s889 = scalar_lea.vmem [#allocation2], 640
    %890 = vst [vmem:[%s889] sm:$0xff] %v873
    %891 = vst [vmem:[%s889 + $0x8] sm:$0xff] %v874
    %892 = vst [vmem:[%s889 + $0x10] sm:$0xff] %v875
    %893 = vst [vmem:[%s889 + $0x18] sm:$0xff] %v876
    %894 = vst [vmem:[%s889 + $0x20] sm:$0xff] %v877
    %895 = vst [vmem:[%s889 + $0x28] sm:$0xff] %v878
    %896 = vst [vmem:[%s889 + $0x30] sm:$0xff] %v879
    %897 = vst [vmem:[%s889 + $0x38] sm:$0xff] %v880
    %898 = vst [vmem:[%s889 + $0x40] sm:$0xff] %v881
    %899 = vst [vmem:[%s889 + $0x48] sm:$0xff] %v882
    %900 = vst [vmem:[%s889 + $0x50] sm:$0xff] %v883
    %901 = vst [vmem:[%s889 + $0x58] sm:$0xff] %v884
    %902 = vst [vmem:[%s889 + $0x60] sm:$0xff] %v885
    %903 = vst [vmem:[%s889 + $0x68] sm:$0xff] %v886
    %904 = vst [vmem:[%s889 + $0x70] sm:$0xff] %v887
    %905 = vst [vmem:[%s889 + $0x78] sm:$0xff] %v888
    %v906 = vlaneseq
    %v907 = vshrl.u32 %v906, 7
    %v908 = vsub.s32 6, %v907
    %v909 = vrot.slane %v108, %v908
    %v910 = vsub.f32 %v31, %v909
    %v911 = vsub.f32 %v36, %v909
    %v912 = vsub.f32 %v41, %v909
    %v913 = vsub.f32 %v46, %v909
    %v914 = vsub.f32 %v51, %v909
    %v915 = vsub.f32 %v56, %v909
    %v916 = vsub.f32 %v61, %v909
    %v917 = vsub.f32 %v66, %v909
    %v918 = vsub.f32 %v71, %v909
    %v919 = vsub.f32 %v76, %v909
    %v920 = vsub.f32 %v81, %v909
    %v921 = vsub.f32 %v86, %v909
    %v922 = vsub.f32 %v91, %v909
    %v923 = vsub.f32 %v96, %v909
    %v924 = vsub.f32 %v101, %v909
    %v925 = vsub.f32 %v106, %v909
    %v926 = vmul.f32 %v910, %v910
    %v927 = vmul.f32 %v911, %v911
    %v928 = vmul.f32 %v912, %v912
    %v929 = vmul.f32 %v913, %v913
    %v930 = vmul.f32 %v914, %v914
    %v931 = vmul.f32 %v915, %v915
    %v932 = vmul.f32 %v916, %v916
    %v933 = vmul.f32 %v917, %v917
    %v934 = vmul.f32 %v918, %v918
    %v935 = vmul.f32 %v919, %v919
    %v936 = vmul.f32 %v920, %v920
    %v937 = vmul.f32 %v921, %v921
    %v938 = vmul.f32 %v922, %v922
    %v939 = vmul.f32 %v923, %v923
    %v940 = vmul.f32 %v924, %v924
    %v941 = vmul.f32 %v925, %v925
    %v942 = vmul.f32 %v926, -256.0
    %v943 = vmul.f32 %v927, -256.0
    %v944 = vmul.f32 %v928, -256.0
    %v945 = vmul.f32 %v929, -256.0
    %v946 = vmul.f32 %v930, -256.0
    %v947 = vmul.f32 %v931, -256.0
    %v948 = vmul.f32 %v932, -256.0
    %v949 = vmul.f32 %v933, -256.0
    %v950 = vmul.f32 %v934, -256.0
    %v951 = vmul.f32 %v935, -256.0
    %v952 = vmul.f32 %v936, -256.0
    %v953 = vmul.f32 %v937, -256.0
    %v954 = vmul.f32 %v938, -256.0
    %v955 = vmul.f32 %v939, -256.0
    %v956 = vmul.f32 %v940, -256.0
    %v957 = vmul.f32 %v941, -256.0
    %v958 = vmul.f32 %v942, 1.442695
    %v959 = vpow.pop %v958
    %v960 = vmul.f32 %v943, 1.442695
    %v961 = vpow.pop %v960
    %v962 = vmul.f32 %v944, 1.442695
    %v963 = vpow.pop %v962
    %v964 = vmul.f32 %v945, 1.442695
    %v965 = vpow.pop %v964
    %v966 = vmul.f32 %v946, 1.442695
    %v967 = vpow.pop %v966
    %v968 = vmul.f32 %v947, 1.442695
    %v969 = vpow.pop %v968
    %v970 = vmul.f32 %v948, 1.442695
    %v971 = vpow.pop %v970
    %v972 = vmul.f32 %v949, 1.442695
    %v973 = vpow.pop %v972
    %v974 = vmul.f32 %v950, 1.442695
    %v975 = vpow.pop %v974
    %v976 = vmul.f32 %v951, 1.442695
    %v977 = vpow.pop %v976
    %v978 = vmul.f32 %v952, 1.442695
    %v979 = vpow.pop %v978
    %v980 = vmul.f32 %v953, 1.442695
    %v981 = vpow.pop %v980
    %v982 = vmul.f32 %v954, 1.442695
    %v983 = vpow.pop %v982
    %v984 = vmul.f32 %v955, 1.442695
    %v985 = vpow.pop %v984
    %v986 = vmul.f32 %v956, 1.442695
    %v987 = vpow.pop %v986
    %v988 = vmul.f32 %v957, 1.442695
    %v989 = vpow.pop %v988
    %990 = vxpose.xlu0.b32.start [1/16] %v959, 128
    %991 = vxpose.xlu0.b32.cont [2/16] %v961, 128
    %992 = vxpose.xlu0.b32.cont [3/16] %v963, 128
    %993 = vxpose.xlu0.b32.cont [4/16] %v965, 128
    %994 = vxpose.xlu0.b32.cont [5/16] %v967, 128
    %995 = vxpose.xlu0.b32.cont [6/16] %v969, 128
    %996 = vxpose.xlu0.b32.cont [7/16] %v971, 128
    %997 = vxpose.xlu0.b32.cont [8/16] %v973, 128
    %998 = vxpose.xlu0.b32.cont [9/16] %v975, 128
    %999 = vxpose.xlu0.b32.cont [10/16] %v977, 128
    %1000 = vxpose.xlu0.b32.cont [11/16] %v979, 128
    %1001 = vxpose.xlu0.b32.cont [12/16] %v981, 128
    %1002 = vxpose.xlu0.b32.cont [13/16] %v983, 128
    %1003 = vxpose.xlu0.b32.cont [14/16] %v985, 128
    %1004 = vxpose.xlu0.b32.cont [15/16] %v987, 128
    %1005 = vxpose.xlu0.b32.end [16/16] %v989, 128
    %v1006 = vpop.trf.xlu0
    %v1007 = vpop.trf.xlu0
    %v1008 = vpop.trf.xlu0
    %v1009 = vpop.trf.xlu0
    %v1010 = vpop.trf.xlu0
    %v1011 = vpop.trf.xlu0
    %v1012 = vpop.trf.xlu0
    %v1013 = vpop.trf.xlu0
    %v1014 = vpop.trf.xlu0
    %v1015 = vpop.trf.xlu0
    %v1016 = vpop.trf.xlu0
    %v1017 = vpop.trf.xlu0
    %v1018 = vpop.trf.xlu0
    %v1019 = vpop.trf.xlu0
    %v1020 = vpop.trf.xlu0
    %v1021 = vpop.trf.xlu0
    %s1022 = scalar_lea.vmem [#allocation2], 768
    %1023 = vst [vmem:[%s1022] sm:$0xff] %v1006
    %1024 = vst [vmem:[%s1022 + $0x8] sm:$0xff] %v1007
    %1025 = vst [vmem:[%s1022 + $0x10] sm:$0xff] %v1008
    %1026 = vst [vmem:[%s1022 + $0x18] sm:$0xff] %v1009
    %1027 = vst [vmem:[%s1022 + $0x20] sm:$0xff] %v1010
    %1028 = vst [vmem:[%s1022 + $0x28] sm:$0xff] %v1011
    %1029 = vst [vmem:[%s1022 + $0x30] sm:$0xff] %v1012
    %1030 = vst [vmem:[%s1022 + $0x38] sm:$0xff] %v1013
    %1031 = vst [vmem:[%s1022 + $0x40] sm:$0xff] %v1014
    %1032 = vst [vmem:[%s1022 + $0x48] sm:$0xff] %v1015
    %1033 = vst [vmem:[%s1022 + $0x50] sm:$0xff] %v1016
    %1034 = vst [vmem:[%s1022 + $0x58] sm:$0xff] %v1017
    %1035 = vst [vmem:[%s1022 + $0x60] sm:$0xff] %v1018
    %1036 = vst [vmem:[%s1022 + $0x68] sm:$0xff] %v1019
    %1037 = vst [vmem:[%s1022 + $0x70] sm:$0xff] %v1020
    %1038 = vst [vmem:[%s1022 + $0x78] sm:$0xff] %v1021
    %v1039 = vlaneseq
    %v1040 = vshrl.u32 %v1039, 7
    %v1041 = vsub.s32 7, %v1040
    %v1042 = vrot.slane %v108, %v1041
    %v1043 = vsub.f32 %v31, %v1042
    %v1044 = vsub.f32 %v36, %v1042
    %v1045 = vsub.f32 %v41, %v1042
    %v1046 = vsub.f32 %v46, %v1042
    %v1047 = vsub.f32 %v51, %v1042
    %v1048 = vsub.f32 %v56, %v1042
    %v1049 = vsub.f32 %v61, %v1042
    %v1050 = vsub.f32 %v66, %v1042
    %v1051 = vsub.f32 %v71, %v1042
    %v1052 = vsub.f32 %v76, %v1042
    %v1053 = vsub.f32 %v81, %v1042
    %v1054 = vsub.f32 %v86, %v1042
    %v1055 = vsub.f32 %v91, %v1042
    %v1056 = vsub.f32 %v96, %v1042
    %v1057 = vsub.f32 %v101, %v1042
    %v1058 = vsub.f32 %v106, %v1042
    %v1059 = vmul.f32 %v1043, %v1043
    %v1060 = vmul.f32 %v1044, %v1044
    %v1061 = vmul.f32 %v1045, %v1045
    %v1062 = vmul.f32 %v1046, %v1046
    %v1063 = vmul.f32 %v1047, %v1047
    %v1064 = vmul.f32 %v1048, %v1048
    %v1065 = vmul.f32 %v1049, %v1049
    %v1066 = vmul.f32 %v1050, %v1050
    %v1067 = vmul.f32 %v1051, %v1051
    %v1068 = vmul.f32 %v1052, %v1052
    %v1069 = vmul.f32 %v1053, %v1053
    %v1070 = vmul.f32 %v1054, %v1054
    %v1071 = vmul.f32 %v1055, %v1055
    %v1072 = vmul.f32 %v1056, %v1056
    %v1073 = vmul.f32 %v1057, %v1057
    %v1074 = vmul.f32 %v1058, %v1058
    %v1075 = vmul.f32 %v1059, -256.0
    %v1076 = vmul.f32 %v1060, -256.0
    %v1077 = vmul.f32 %v1061, -256.0
    %v1078 = vmul.f32 %v1062, -256.0
    %v1079 = vmul.f32 %v1063, -256.0
    %v1080 = vmul.f32 %v1064, -256.0
    %v1081 = vmul.f32 %v1065, -256.0
    %v1082 = vmul.f32 %v1066, -256.0
    %v1083 = vmul.f32 %v1067, -256.0
    %v1084 = vmul.f32 %v1068, -256.0
    %v1085 = vmul.f32 %v1069, -256.0
    %v1086 = vmul.f32 %v1070, -256.0
    %v1087 = vmul.f32 %v1071, -256.0
    %v1088 = vmul.f32 %v1072, -256.0
    %v1089 = vmul.f32 %v1073, -256.0
    %v1090 = vmul.f32 %v1074, -256.0
    %v1091 = vmul.f32 %v1075, 1.442695
    %v1092 = vpow.pop %v1091
    %v1093 = vmul.f32 %v1076, 1.442695
    %v1094 = vpow.pop %v1093
    %v1095 = vmul.f32 %v1077, 1.442695
    %v1096 = vpow.pop %v1095
    %v1097 = vmul.f32 %v1078, 1.442695
    %v1098 = vpow.pop %v1097
    %v1099 = vmul.f32 %v1079, 1.442695
    %v1100 = vpow.pop %v1099
    %v1101 = vmul.f32 %v1080, 1.442695
    %v1102 = vpow.pop %v1101
    %v1103 = vmul.f32 %v1081, 1.442695
    %v1104 = vpow.pop %v1103
    %v1105 = vmul.f32 %v1082, 1.442695
    %v1106 = vpow.pop %v1105
    %v1107 = vmul.f32 %v1083, 1.442695
    %v1108 = vpow.pop %v1107
    %v1109 = vmul.f32 %v1084, 1.442695
    %v1110 = vpow.pop %v1109
    %v1111 = vmul.f32 %v1085, 1.442695
    %v1112 = vpow.pop %v1111
    %v1113 = vmul.f32 %v1086, 1.442695
    %v1114 = vpow.pop %v1113
    %v1115 = vmul.f32 %v1087, 1.442695
    %v1116 = vpow.pop %v1115
    %v1117 = vmul.f32 %v1088, 1.442695
    %v1118 = vpow.pop %v1117
    %v1119 = vmul.f32 %v1089, 1.442695
    %v1120 = vpow.pop %v1119
    %v1121 = vmul.f32 %v1090, 1.442695
    %v1122 = vpow.pop %v1121
    %1123 = vxpose.xlu0.b32.start [1/16] %v1092, 128
    %1124 = vxpose.xlu0.b32.cont [2/16] %v1094, 128
    %1125 = vxpose.xlu0.b32.cont [3/16] %v1096, 128
    %1126 = vxpose.xlu0.b32.cont [4/16] %v1098, 128
    %1127 = vxpose.xlu0.b32.cont [5/16] %v1100, 128
    %1128 = vxpose.xlu0.b32.cont [6/16] %v1102, 128
    %1129 = vxpose.xlu0.b32.cont [7/16] %v1104, 128
    %1130 = vxpose.xlu0.b32.cont [8/16] %v1106, 128
    %1131 = vxpose.xlu0.b32.cont [9/16] %v1108, 128
    %1132 = vxpose.xlu0.b32.cont [10/16] %v1110, 128
    %1133 = vxpose.xlu0.b32.cont [11/16] %v1112, 128
    %1134 = vxpose.xlu0.b32.cont [12/16] %v1114, 128
    %1135 = vxpose.xlu0.b32.cont [13/16] %v1116, 128
    %1136 = vxpose.xlu0.b32.cont [14/16] %v1118, 128
    %1137 = vxpose.xlu0.b32.cont [15/16] %v1120, 128
    %1138 = vxpose.xlu0.b32.end [16/16] %v1122, 128
    %v1139 = vpop.trf.xlu0
    %v1140 = vpop.trf.xlu0
    %v1141 = vpop.trf.xlu0
    %v1142 = vpop.trf.xlu0
    %v1143 = vpop.trf.xlu0
    %v1144 = vpop.trf.xlu0
    %v1145 = vpop.trf.xlu0
    %v1146 = vpop.trf.xlu0
    %v1147 = vpop.trf.xlu0
    %v1148 = vpop.trf.xlu0
    %v1149 = vpop.trf.xlu0
    %v1150 = vpop.trf.xlu0
    %v1151 = vpop.trf.xlu0
    %v1152 = vpop.trf.xlu0
    %v1153 = vpop.trf.xlu0
    %v1154 = vpop.trf.xlu0
    %s1155 = scalar_lea.vmem [#allocation2], 896
    %1156 = vst [vmem:[%s1155] sm:$0xff] %v1139
    %1157 = vst [vmem:[%s1155 + $0x8] sm:$0xff] %v1140
    %1158 = vst [vmem:[%s1155 + $0x10] sm:$0xff] %v1141
    %1159 = vst [vmem:[%s1155 + $0x18] sm:$0xff] %v1142
    %1160 = vst [vmem:[%s1155 + $0x20] sm:$0xff] %v1143
    %1161 = vst [vmem:[%s1155 + $0x28] sm:$0xff] %v1144
    %1162 = vst [vmem:[%s1155 + $0x30] sm:$0xff] %v1145
    %1163 = vst [vmem:[%s1155 + $0x38] sm:$0xff] %v1146
    %1164 = vst [vmem:[%s1155 + $0x40] sm:$0xff] %v1147
    %1165 = vst [vmem:[%s1155 + $0x48] sm:$0xff] %v1148
    %1166 = vst [vmem:[%s1155 + $0x50] sm:$0xff] %v1149
    %1167 = vst [vmem:[%s1155 + $0x58] sm:$0xff] %v1150
    %1168 = vst [vmem:[%s1155 + $0x60] sm:$0xff] %v1151
    %1169 = vst [vmem:[%s1155 + $0x68] sm:$0xff] %v1152
    %1170 = vst [vmem:[%s1155 + $0x70] sm:$0xff] %v1153
    %1171 = vst [vmem:[%s1155 + $0x78] sm:$0xff] %v1154
    // Predicated region
    $region10: #{tpu_custom_call.1} parent=1 // pred_check
      _
    $region11: #{tpu_custom_call.1} parent=1 // pred_check_branch
      %1173 = sbr.rel (0) target = $region13
    $region12: #{tpu_custom_call.1} parent=1 // pred_region
      %s1175 = ssub.s32 16384, 16384
      %1176 = vsyncadd [#allocation3], %s1175
      %s1177 = sshll.u32 [#allocation2], 4
      %s1178 = int_to_ptr.vmem [resolvable:$true] %s1177
      %1183 = dma.vmem_to_hbm [thread:$0]  %s1178, 16384, %s2, [#allocation3], 128, 128, 8
    $region13: #{tpu_custom_call.1} parent=1 // pred_fallthru
      _
    // Predicated region
    $region14: #{tpu_custom_call.1} parent=1 // pred_check
      _
    $region15: #{tpu_custom_call.1} parent=1 // pred_check_branch
      %1185 = sbr.rel (0) target = $region17
    $region16: #{tpu_custom_call.1} parent=1 // pred_region
      %1186 = dma.done [#allocation3], 16384
    $region17: #{tpu_custom_call.1} parent=1 // pred_fallthru
      _
    %1187 = vsyncpa [#allocation3], 1

</llo_original>
